<compile_context>
chip_gen: v7x
topology: tpu7x:2x2x1
jax: 0.10.0
libtpu: 0.0.40
codegen_flags: <defaults>
</compile_context>

<pallas_src>
import jax
import jax.numpy as jnp
from jax.experimental import pallas as pl
from jax.experimental.pallas import tpu as pltpu


def _round_up(x, m):
    return (x + m - 1) // m * m


def _pick_images_per_step(n, cin, hw):
    # Keep >= 2 grid steps when possible (v7x has 2 TensorCores; the batch axis is "parallel"),
    # batch as many images per step as a modest im2col working-set budget allows.
    b = n // 2 if (n >= 2 and n % 2 == 0) else 1
    cap = max(1, (512 * 1024) // (9 * cin * hw * 4))   # ~512 KiB of f32 col slab per step
    b = max(1, min(b, cap))
    while n % b:
        b -= 1
    return b


# ---------------- BN batch-stats prologue: one fused pass producing sum and sum-of-squares ----------------
def _stats_kernel(x_ref, s1_ref, s2_ref):
    @pl.when(pl.program_id(0) == 0)
    def _():
        s1_ref[...] = jnp.zeros_like(s1_ref)
        s2_ref[...] = jnp.zeros_like(s2_ref)
    xb = x_ref[...]                                   # (B, Cin, HW) f32
    ps1 = jnp.sum(xb, axis=0)                         # (Cin, HW)
    ps2 = jnp.sum(xb * xb, axis=0)                    # (Cin, HW)
    s1_ref[...] += jnp.sum(ps1, axis=1, keepdims=True)
    s2_ref[...] += jnp.sum(ps2, axis=1, keepdims=True)


def _batch_stats(x3, B):
    N, Cin, HW = x3.shape
    s1, s2 = pl.pallas_call(
        _stats_kernel,
        out_shape=(jax.ShapeDtypeStruct((Cin, 1), jnp.float32),
                   jax.ShapeDtypeStruct((Cin, 1), jnp.float32)),
        grid=(N // B,),
        in_specs=[pl.BlockSpec((B, Cin, HW), lambda n: (n, 0, 0))],
        out_specs=(pl.BlockSpec((Cin, 1), lambda n: (0, 0)),
                   pl.BlockSpec((Cin, 1), lambda n: (0, 0))),
        compiler_params=pltpu.CompilerParams(
            dimension_semantics=("arbitrary",),          # serial accumulation into resident outputs
            vmem_limit_bytes=48 * 1024 * 1024),
    )(x3)
    cnt = float(N * HW)
    mean = s1 / cnt
    # One-pass variance can cancel slightly negative in f32 -> clamp before rsqrt.
    var = jnp.maximum(s2 / cnt - mean * mean, 0.0)
    return mean, var


# ---------------- Fused BN + ReLU + 3x3 conv + channel-concat kernel ----------------
def _make_fused_kernel(Cin, Cg_pad, H, W, B):
    HW = H * W

    def kernel(x_ref, scale_ref, shift_ref, w_ref, o_ref):
        # x_ref:     (B, Cin, HW)          f32, channels-first, lane-dense spatial
        # scale_ref: (Cin, 1)              gamma / sqrt(var + eps)
        # shift_ref: (Cin, 1)              beta - mean * scale
        # w_ref:     (Cg_pad, 9*Cin)       bf16 conv weight, tap-major [(dy*3+dx)*Cin + c], zero-padded rows
        # o_ref:     (B, Cin+Cg_pad, HW)   f32 concat output, channel dim padded to a multiple of 8

        # concat part 1: raw x passthrough (full-sublane, unmasked, lane-dense store).
        o_ref[:, :Cin, :] = x_ref[...]

        scale = scale_ref[...]
        shift = shift_ref[...]

        # Horizontal-border masks applied ONCE on the source (2 selects total, hoisted out of the
        # 3x3 tap loop): dx=0 taps only ever read spurious values from source column W-1,
        # dx=2 taps only from source column 0; vertical borders fall into the shift zero-padding.
        lane = jax.lax.broadcasted_iota(jnp.int32, (1, HW), 1)
        colx = lane % W
        mask_last_col = colx == (W - 1)
        mask_first_col = colx == 0

        cols = []
        for b in range(B):
            # BN + ReLU in f32 on the VPU.
            a = jnp.maximum(x_ref[b] * scale + shift, 0.0)           # (Cin, HW)
            src_by_dx = (jnp.where(mask_last_col, 0.0, a),           # source for dx = 0 taps
                         a,                                          # source for dx = 1 taps
                         jnp.where(mask_first_col, 0.0, a))          # source for dx = 2 taps
            taps = []
            for dy in range(3):
                for dx in range(3):
                    src = src_by_dx[dx]
                    off = (dy - 1) * W + (dx - 1)                    # tap[p] = src[p + off]
                    if off == 0:
                        t = src
                    elif off > 0:
                        t = jnp.concatenate(
                            [src[:, off:], jnp.zeros((Cin, off), jnp.float32)], axis=1)
                    else:
                        t = jnp.concatenate(
                            [jnp.zeros((Cin, -off), jnp.float32), src[:, :off]], axis=1)
                    taps.append(t)
            cols.append(jnp.concatenate(taps, axis=0))               # (9*Cin, HW) f32, in-register

        # One big-K, fat-N MXU dot in bf16 with f32 accumulate:
        #   (Cg_pad, 9*Cin) @ (9*Cin, B*HW) -> (Cg_pad, B*HW)
        col = jnp.concatenate(cols, axis=1).astype(jnp.bfloat16)
        res = jnp.dot(w_ref[...], col, preferred_element_type=jnp.float32)

        # concat part 2: conv result into the padded channel tail (full-sublane stores).
        for b in range(B):
            o_ref[b, Cin:, :] = res[:, b * HW:(b + 1) * HW]

    return kernel


def single_layer_forward(x_nchw, params, eps=1e-5):
    """BN(train) -> ReLU -> conv3x3(pad=1, no bias) -> concat(x, out) on channels. NCHW in/out."""
    x = x_nchw.astype(jnp.float32)
    N, Cin, H, W = x.shape
    HW = H * W
    w2col = params["w2col"]
    Cg = w2col.shape[0]
    C_out = Cin + Cg
    C_pad = _round_up(C_out, 8)
    Cg_pad = C_pad - Cin          # Cin % 8 == 0 here, so conv rows land on full sublane groups

    B = _pick_images_per_step(N, Cin, HW)
    x3 = x.reshape(N, Cin, HW)

    # BN (training-mode) batch statistics, folded into per-channel scale/shift.
    mean, var = _batch_stats(x3, B)
    scale = params["gamma"].astype(jnp.float32).reshape(Cin, 1) * jax.lax.rsqrt(var + eps)
    shift = params["beta"].astype(jnp.float32).reshape(Cin, 1) - mean * scale

    # Zero-pad the conv weight rows to Cg_pad and cast to bf16 for the MXU.
    w_pad = jnp.zeros((Cg_pad, 9 * Cin), jnp.float32).at[:Cg].set(
        w2col.astype(jnp.float32)).astype(jnp.bfloat16)

    kernel = _make_fused_kernel(Cin, Cg_pad, H, W, B)
    out_pad = pl.pallas_call(
        kernel,
        out_shape=jax.ShapeDtypeStruct((N, C_pad, HW), jnp.float32),
        grid=(N // B,),
        in_specs=[
            pl.BlockSpec((B, Cin, HW), lambda n: (n, 0, 0)),
            pl.BlockSpec((Cin, 1), lambda n: (0, 0)),
            pl.BlockSpec((Cin, 1), lambda n: (0, 0)),
            pl.BlockSpec((Cg_pad, 9 * Cin), lambda n: (0, 0)),
        ],
        out_specs=pl.BlockSpec((B, C_pad, HW), lambda n: (n, 0, 0)),
        compiler_params=pltpu.CompilerParams(
            dimension_semantics=("parallel",),            # batch steps split across v7x TensorCores
            vmem_limit_bytes=48 * 1024 * 1024),
    )(x3, scale, shift, w_pad)

    # Slice off the channel padding and restore NCHW.
    return out_pad[:, :C_out, :].reshape(N, C_out, H, W)


def single_layer_reference(x_nchw, gamma, beta, w_torch, eps=1e-5):
    """Pure-JAX reference with identical (training-mode BN) semantics, NCHW."""
    x = x_nchw.astype(jnp.float32)
    m = jnp.mean(x, axis=(0, 2, 3), keepdims=True)
    v = jnp.mean(jnp.square(x - m), axis=(0, 2, 3), keepdims=True)
    xn = (x - m) / jnp.sqrt(v + eps) * gamma.reshape(1, -1, 1, 1) + beta.reshape(1, -1, 1, 1)
    a = jax.nn.relu(xn)
    out = jax.lax.conv_general_dilated(
        a, w_torch, window_strides=(1, 1), padding=((1, 1), (1, 1)),
        dimension_numbers=("NCHW", "OIHW", "NCHW"))
    return jnp.concatenate([x, out], axis=1)


if __name__ == "__main__":
    # nChannels=8, growthRate=4 -> output channels = 8 + 4 = 12
    N, C, H, W = 2, 8, 16, 16
    growth = 4

    key = jax.random.PRNGKey(0)
    kx, kw = jax.random.split(key)
    x = jax.random.normal(kx, (N, C, H, W), jnp.float32)

    # Conv weight in PyTorch OIHW layout; the kernel consumes the tap-major (Cg, 9*Cin) form.
    w_torch = jax.random.normal(kw, (growth, C, 3, 3), jnp.float32) / jnp.sqrt(9.0 * C)
    params = dict(
        gamma=jnp.ones((C,), jnp.float32),
        beta=jnp.zeros((C,), jnp.float32),
        w2col=jnp.transpose(w_torch, (0, 2, 3, 1)).reshape(growth, 9 * C),  # [g, (dy, dx), c]
    )

    out = jax.jit(single_layer_forward)(x, params)
    out = jax.block_until_ready(out)

    ref = single_layer_reference(x, params["gamma"], params["beta"], w_torch)
    assert out.shape == (N, C + growth, H, W), out.shape
    # Concat part (raw x) is exact; conv part uses bf16 MXU operands with f32 accumulate.
    err = float(jnp.max(jnp.abs(out - ref)))
    assert err < 5e-2, err

    print("KERNEL_OK")
</pallas_src>

<mosaic_0001>
module attributes {stable_mosaic.version = 11 : i64} {
  func.func @kernel(%arg0: i32, %arg1: memref<1x8x256xf32, #tpu.memory_space<vmem>>, %arg2: memref<8x1xf32, #tpu.memory_space<vmem>>, %arg3: memref<8x1xf32, #tpu.memory_space<vmem>>, %arg4: memref<8x72xbf16, #tpu.memory_space<vmem>>, %arg5: memref<1x16x256xf32, #tpu.memory_space<vmem>>) attributes {dimension_semantics = [#tpu.dimension_semantics<parallel>], iteration_bounds = array<i64: 2>, scalar_prefetch = 0 : i64, scratch_operands = 0 : i64, tpu.core_type = #tpu.core_type<tc>, window_params = [{transform_indices = @transform_0, window_bounds = array<i64: 1, 8, 256>}, {pipeline_mode = #tpu.pipeline_mode<synchronous>, transform_indices = @transform_1, window_bounds = array<i64: 8, 1>}, {pipeline_mode = #tpu.pipeline_mode<synchronous>, transform_indices = @transform_2, window_bounds = array<i64: 8, 1>}, {pipeline_mode = #tpu.pipeline_mode<synchronous>, transform_indices = @transform_3, window_bounds = array<i64: 8, 72>}, {transform_indices = @transform_4, window_bounds = array<i64: 1, 16, 256>}]} {
    %c0 = arith.constant 0 : index
    %c0_0 = arith.constant 0 : index
    %c0_1 = arith.constant 0 : index
    %0 = vector.load %arg1[%c0, %c0_0, %c0_1] : memref<1x8x256xf32, #tpu.memory_space<vmem>>, vector<1x8x256xf32>
    %c0_2 = arith.constant 0 : index
    %c0_3 = arith.constant 0 : index
    %c0_4 = arith.constant 0 : index
    %1 = vector.load %arg5[%c0_2, %c0_3, %c0_4] : memref<1x16x256xf32, #tpu.memory_space<vmem>>, vector<1x8x256xf32>
    tpu.vector_store %arg5[%c0_2, %c0_3, %c0_4], %0 {strides = array<i32>} : memref<1x16x256xf32, #tpu.memory_space<vmem>>, vector<1x8x256xf32>,
    %c0_5 = arith.constant 0 : index
    %c0_6 = arith.constant 0 : index
    %2 = vector.load %arg2[%c0_5, %c0_6] : memref<8x1xf32, #tpu.memory_space<vmem>>, vector<8x1xf32>
    %c0_7 = arith.constant 0 : index
    %c0_8 = arith.constant 0 : index
    %3 = vector.load %arg3[%c0_7, %c0_8] : memref<8x1xf32, #tpu.memory_space<vmem>>, vector<8x1xf32>
    %4 = tpu.iota {dimensions = array<i32: 1>} : vector<1x256xi32>
    %c16_i32 = arith.constant 16 : i32
    %c0_i32 = arith.constant 0 : i32
    %5 = arith.cmpi eq, %c16_i32, %c0_i32 : i32
    %c1_i32 = arith.constant 1 : i32
    %6 = arith.select %5, %c1_i32, %c16_i32 : i32
    %7 = vector.broadcast %6 : i32 to vector<1x256xi32>
    %8 = arith.remsi %4, %7 : vector<1x256xi32>
    %c0_i32_9 = arith.constant 0 : i32
    %9 = vector.broadcast %c0_i32_9 : i32 to vector<1x256xi32>
    %10 = arith.cmpi ne, %8, %9 : vector<1x256xi32>
    %c0_i32_10 = arith.constant 0 : i32
    %11 = vector.broadcast %c0_i32_10 : i32 to vector<1x256xi32>
    %12 = arith.cmpi slt, %8, %11 : vector<1x256xi32>
    %c0_i32_11 = arith.constant 0 : i32
    %13 = arith.cmpi slt, %6, %c0_i32_11 : i32
    %14 = vector.broadcast %13 : i1 to vector<1x256xi1>
    %15 = vector.broadcast %14 : vector<1x256xi1> to vector<1x256xi1>
    %16 = arith.xori %12, %15 : vector<1x256xi1>
    %17 = arith.andi %16, %10 : vector<1x256xi1>
    %18 = vector.broadcast %6 : i32 to vector<1x256xi32>
    %19 = arith.addi %8, %18 : vector<1x256xi32>
    %20 = arith.select %17, %19, %8 : vector<1x256xi1>, vector<1x256xi32>
    %c15_i32 = arith.constant 15 : i32
    %21 = vector.broadcast %c15_i32 : i32 to vector<1x256xi32>
    %22 = arith.cmpi eq, %20, %21 : vector<1x256xi32>
    %c0_i32_12 = arith.constant 0 : i32
    %23 = vector.broadcast %c0_i32_12 : i32 to vector<1x256xi32>
    %24 = arith.cmpi eq, %20, %23 : vector<1x256xi32>
    %c0_13 = arith.constant 0 : index
    %c0_14 = arith.constant 0 : index
    %c0_15 = arith.constant 0 : index
    %25 = vector.load %arg1[%c0_13, %c0_14, %c0_15] : memref<1x8x256xf32, #tpu.memory_space<vmem>>, vector<1x8x256xf32>
    %26 = vector.shape_cast %25 : vector<1x8x256xf32> to vector<8x256xf32>
    %27 = vector.broadcast %2 : vector<8x1xf32> to vector<8x256xf32>
    %28 = arith.mulf %26, %27 : vector<8x256xf32>
    %29 = vector.broadcast %3 : vector<8x1xf32> to vector<8x256xf32>
    %30 = arith.addf %28, %29 : vector<8x256xf32>
    %cst = arith.constant 0.000000e+00 : f32
    %31 = vector.broadcast %cst : f32 to vector<8x256xf32>
    %32 = arith.maximumf %30, %31 : vector<8x256xf32>
    %cst_16 = arith.constant 0.000000e+00 : f32
    %33 = vector.shape_cast %22 : vector<1x256xi1> to vector<1x256xi1>
    %34 = vector.broadcast %33 : vector<1x256xi1> to vector<8x256xi1>
    %35 = vector.broadcast %cst_16 : f32 to vector<8x256xf32>
    %36 = arith.select %34, %35, %32 : vector<8x256xi1>, vector<8x256xf32>
    %cst_17 = arith.constant 0.000000e+00 : f32
    %37 = vector.shape_cast %24 : vector<1x256xi1> to vector<1x256xi1>
    %38 = vector.broadcast %37 : vector<1x256xi1> to vector<8x256xi1>
    %39 = vector.broadcast %cst_17 : f32 to vector<8x256xf32>
    %40 = arith.select %38, %39, %32 : vector<8x256xi1>, vector<8x256xf32>
    %cst_18 = arith.constant 0.000000e+00 : f32
    %41 = vector.broadcast %cst_18 : f32 to vector<8x17xf32>
    %42 = vector.extract_strided_slice %36 {offsets = [0, 0], sizes = [8, 239], strides = [1, 1]} : vector<8x256xf32> to vector<8x239xf32>
    %43 = tpu.concatenate %41, %42 in 1 : vector<8x17xf32>, vector<8x239xf32> -> vector<8x256xf32>
    %cst_19 = arith.constant 0.000000e+00 : f32
    %44 = vector.broadcast %cst_19 : f32 to vector<8x16xf32>
    %45 = vector.extract_strided_slice %32 {offsets = [0, 0], sizes = [8, 240], strides = [1, 1]} : vector<8x256xf32> to vector<8x240xf32>
    %46 = tpu.concatenate %44, %45 in 1 : vector<8x16xf32>, vector<8x240xf32> -> vector<8x256xf32>
    %cst_20 = arith.constant 0.000000e+00 : f32
    %47 = vector.broadcast %cst_20 : f32 to vector<8x15xf32>
    %48 = vector.extract_strided_slice %40 {offsets = [0, 0], sizes = [8, 241], strides = [1, 1]} : vector<8x256xf32> to vector<8x241xf32>
    %49 = tpu.concatenate %47, %48 in 1 : vector<8x15xf32>, vector<8x241xf32> -> vector<8x256xf32>
    %cst_21 = arith.constant 0.000000e+00 : f32
    %50 = vector.broadcast %cst_21 : f32 to vector<8x1xf32>
    %51 = vector.extract_strided_slice %36 {offsets = [0, 0], sizes = [8, 255], strides = [1, 1]} : vector<8x256xf32> to vector<8x255xf32>
    %52 = tpu.concatenate %50, %51 in 1 : vector<8x1xf32>, vector<8x255xf32> -> vector<8x256xf32>
    %53 = vector.extract_strided_slice %40 {offsets = [0, 1], sizes = [8, 255], strides = [1, 1]} : vector<8x256xf32> to vector<8x255xf32>
    %cst_22 = arith.constant 0.000000e+00 : f32
    %54 = vector.broadcast %cst_22 : f32 to vector<8x1xf32>
    %55 = tpu.concatenate %53, %54 in 1 : vector<8x255xf32>, vector<8x1xf32> -> vector<8x256xf32>
    %56 = vector.extract_strided_slice %36 {offsets = [0, 15], sizes = [8, 241], strides = [1, 1]} : vector<8x256xf32> to vector<8x241xf32>
    %cst_23 = arith.constant 0.000000e+00 : f32
    %57 = vector.broadcast %cst_23 : f32 to vector<8x15xf32>
    %58 = tpu.concatenate %56, %57 in 1 : vector<8x241xf32>, vector<8x15xf32> -> vector<8x256xf32>
    %59 = vector.extract_strided_slice %32 {offsets = [0, 16], sizes = [8, 240], strides = [1, 1]} : vector<8x256xf32> to vector<8x240xf32>
    %cst_24 = arith.constant 0.000000e+00 : f32
    %60 = vector.broadcast %cst_24 : f32 to vector<8x16xf32>
    %61 = tpu.concatenate %59, %60 in 1 : vector<8x240xf32>, vector<8x16xf32> -> vector<8x256xf32>
    %62 = vector.extract_strided_slice %40 {offsets = [0, 17], sizes = [8, 239], strides = [1, 1]} : vector<8x256xf32> to vector<8x239xf32>
    %cst_25 = arith.constant 0.000000e+00 : f32
    %63 = vector.broadcast %cst_25 : f32 to vector<8x17xf32>
    %64 = tpu.concatenate %62, %63 in 1 : vector<8x239xf32>, vector<8x17xf32> -> vector<8x256xf32>
    %65 = tpu.concatenate %43, %46, %49, %52, %32, %55, %58, %61, %64 in 0 : vector<8x256xf32>, vector<8x256xf32>, vector<8x256xf32>, vector<8x256xf32>, vector<8x256xf32>, vector<8x256xf32>, vector<8x256xf32>, vector<8x256xf32>, vector<8x256xf32> -> vector<72x256xf32>
    %66 = arith.truncf %65 : vector<72x256xf32> to vector<72x256xbf16>
    %c0_26 = arith.constant 0 : index
    %c0_27 = arith.constant 0 : index
    %67 = vector.load %arg4[%c0_26, %c0_27] : memref<8x72xbf16, #tpu.memory_space<vmem>>, vector<8x72xbf16>
    %cst_28 = arith.constant dense<0.000000e+00> : vector<8x256xf32>
    %68 = tpu.matmul %67, %66, %cst_28 {dimension_numbers = #tpu.dot_dimension_numbers<[1], [0], [0], [1], [0, 0, 1, 1], [], []>} : vector<8x72xbf16>, vector<72x256xbf16>, vector<8x256xf32> -> vector<8x256xf32>
    %c0_29 = arith.constant 0 : index
    %c8 = arith.constant 8 : index
    %c0_30 = arith.constant 0 : index
    %69 = vector.load %arg5[%c0_29, %c8, %c0_30] : memref<1x16x256xf32, #tpu.memory_space<vmem>>, vector<1x8x256xf32>
    %70 = vector.shape_cast %69 : vector<1x8x256xf32> to vector<8x256xf32>
    %71 = vector.shape_cast %68 : vector<8x256xf32> to vector<1x8x256xf32>
    tpu.vector_store %arg5[%c0_29, %c8, %c0_30], %71 {strides = array<i32>} : memref<1x16x256xf32, #tpu.memory_space<vmem>>, vector<1x8x256xf32>,
    return
  }
  func.func @transform_0(%arg0: i32) -> (i32, i32, i32) {
    %c0_i32 = arith.constant 0 : i32
    %c0_i32_0 = arith.constant 0 : i32
    %c0_i32_1 = arith.constant 0 : i32
    return %arg0, %c0_i32, %c0_i32_0 : i32, i32, i32
  }
  func.func @transform_1(%arg0: i32) -> (i32, i32) {
    %c0_i32 = arith.constant 0 : i32
    %c0_i32_0 = arith.constant 0 : i32
    %c0_i32_1 = arith.constant 0 : i32
    return %c0_i32, %c0_i32_0 : i32, i32
  }
  func.func @transform_2(%arg0: i32) -> (i32, i32) {
    %c0_i32 = arith.constant 0 : i32
    %c0_i32_0 = arith.constant 0 : i32
    %c0_i32_1 = arith.constant 0 : i32
    return %c0_i32, %c0_i32_0 : i32, i32
  }
  func.func @transform_3(%arg0: i32) -> (i32, i32) {
    %c0_i32 = arith.constant 0 : i32
    %c0_i32_0 = arith.constant 0 : i32
    %c0_i32_1 = arith.constant 0 : i32
    return %c0_i32, %c0_i32_0 : i32, i32
  }
  func.func @transform_4(%arg0: i32) -> (i32, i32, i32) {
    %c0_i32 = arith.constant 0 : i32
    %c0_i32_0 = arith.constant 0 : i32
    %c0_i32_1 = arith.constant 0 : i32
    return %arg0, %c0_i32, %c0_i32_0 : i32, i32, i32
  }
}

module attributes {stable_mosaic.version = 11 : i64} {
  func.func @_stats_kernel(%arg0: i32, %arg1: memref<1x8x256xf32, #tpu.memory_space<vmem>>, %arg2: memref<8x1xf32, #tpu.memory_space<vmem>>, %arg3: memref<8x1xf32, #tpu.memory_space<vmem>>) attributes {dimension_semantics = [#tpu.dimension_semantics<arbitrary>], iteration_bounds = array<i64: 2>, scalar_prefetch = 0 : i64, scratch_operands = 0 : i64, tpu.core_type = #tpu.core_type<tc>, window_params = [{transform_indices = @transform_0, window_bounds = array<i64: 1, 8, 256>}, {pipeline_mode = #tpu.pipeline_mode<synchronous>, transform_indices = @transform_1, window_bounds = array<i64: 8, 1>}, {pipeline_mode = #tpu.pipeline_mode<synchronous>, transform_indices = @transform_2, window_bounds = array<i64: 8, 1>}]} {
    %c0_i32 = arith.constant 0 : i32
    %0 = arith.cmpi eq, %arg0, %c0_i32 : i32
    %1 = arith.extui %0 : i1 to i32
    %c0_i32_0 = arith.constant 0 : i32
    %2 = arith.cmpi ne, %1, %c0_i32_0 : i32
    scf.if %2 {
      %cst_14 = arith.constant 0.000000e+00 : f32
      %17 = vector.broadcast %cst_14 : f32 to vector<8x1xf32>
      %c0_15 = arith.constant 0 : index
      %c0_16 = arith.constant 0 : index
      %18 = vector.load %arg2[%c0_15, %c0_16] : memref<8x1xf32, #tpu.memory_space<vmem>>, vector<8x1xf32>
      tpu.vector_store %arg2[%c0_15, %c0_16], %17 {strides = array<i32>} : memref<8x1xf32, #tpu.memory_space<vmem>>, vector<8x1xf32>,
      %cst_17 = arith.constant 0.000000e+00 : f32
      %19 = vector.broadcast %cst_17 : f32 to vector<8x1xf32>
      %c0_18 = arith.constant 0 : index
      %c0_19 = arith.constant 0 : index
      %20 = vector.load %arg3[%c0_18, %c0_19] : memref<8x1xf32, #tpu.memory_space<vmem>>, vector<8x1xf32>
      tpu.vector_store %arg3[%c0_18, %c0_19], %19 {strides = array<i32>} : memref<8x1xf32, #tpu.memory_space<vmem>>, vector<8x1xf32>,
    } else {
    }
    %c0 = arith.constant 0 : index
    %c0_1 = arith.constant 0 : index
    %c0_2 = arith.constant 0 : index
    %3 = vector.load %arg1[%c0, %c0_1, %c0_2] : memref<1x8x256xf32, #tpu.memory_space<vmem>>, vector<1x8x256xf32>
    %cst = arith.constant dense<0.000000e+00> : vector<8x256xf32>
    %4 = vector.multi_reduction <add>, %3, %cst [0] : vector<1x8x256xf32> to vector<8x256xf32>
    %5 = arith.mulf %3, %3 : vector<1x8x256xf32>
    %cst_3 = arith.constant dense<0.000000e+00> : vector<8x256xf32>
    %6 = vector.multi_reduction <add>, %5, %cst_3 [0] : vector<1x8x256xf32> to vector<8x256xf32>
    %c0_4 = arith.constant 0 : index
    %c0_5 = arith.constant 0 : index
    %7 = vector.load %arg2[%c0_4, %c0_5] : memref<8x1xf32, #tpu.memory_space<vmem>>, vector<8x1xf32>
    %cst_6 = arith.constant dense<0.000000e+00> : vector<8xf32>
    %8 = vector.multi_reduction <add>, %4, %cst_6 [1] : vector<8x256xf32> to vector<8xf32>
    %9 = vector.shape_cast %8 : vector<8xf32> to vector<8x1xf32>
    %10 = arith.addf %7, %9 : vector<8x1xf32>
    %c0_7 = arith.constant 0 : index
    %c0_8 = arith.constant 0 : index
    %11 = vector.load %arg2[%c0_7, %c0_8] : memref<8x1xf32, #tpu.memory_space<vmem>>, vector<8x1xf32>
    tpu.vector_store %arg2[%c0_7, %c0_8], %10 {strides = array<i32>} : memref<8x1xf32, #tpu.memory_space<vmem>>, vector<8x1xf32>,
    %c0_9 = arith.constant 0 : index
    %c0_10 = arith.constant 0 : index
    %12 = vector.load %arg3[%c0_9, %c0_10] : memref<8x1xf32, #tpu.memory_space<vmem>>, vector<8x1xf32>
    %cst_11 = arith.constant dense<0.000000e+00> : vector<8xf32>
    %13 = vector.multi_reduction <add>, %6, %cst_11 [1] : vector<8x256xf32> to vector<8xf32>
    %14 = vector.shape_cast %13 : vector<8xf32> to vector<8x1xf32>
    %15 = arith.addf %12, %14 : vector<8x1xf32>
    %c0_12 = arith.constant 0 : index
    %c0_13 = arith.constant 0 : index
    %16 = vector.load %arg3[%c0_12, %c0_13] : memref<8x1xf32, #tpu.memory_space<vmem>>, vector<8x1xf32>
    tpu.vector_store %arg3[%c0_12, %c0_13], %15 {strides = array<i32>} : memref<8x1xf32, #tpu.memory_space<vmem>>, vector<8x1xf32>,
    return
  }
  func.func @transform_0(%arg0: i32) -> (i32, i32, i32) {
    %c0_i32 = arith.constant 0 : i32
    %c0_i32_0 = arith.constant 0 : i32
    %c0_i32_1 = arith.constant 0 : i32
    return %arg0, %c0_i32, %c0_i32_0 : i32, i32, i32
  }
  func.func @transform_1(%arg0: i32) -> (i32, i32) {
    %c0_i32 = arith.constant 0 : i32
    %c0_i32_0 = arith.constant 0 : i32
    %c0_i32_1 = arith.constant 0 : i32
    return %c0_i32, %c0_i32_0 : i32, i32
  }
  func.func @transform_2(%arg0: i32) -> (i32, i32) {
    %c0_i32 = arith.constant 0 : i32
    %c0_i32_0 = arith.constant 0 : i32
    %c0_i32_1 = arith.constant 0 : i32
    return %c0_i32, %c0_i32_0 : i32, i32
  }
}

</mosaic_0001>

<llo_original>
// kernel: single_layer_forward.2
$region0: #{single_layer_forward.2}
  #allocation0 [shape = 'u32[]', space=smem, size = 0x4, offset = 0x4, fixed_abs, tag = 'smem constant byte address 0x4 - core index']
  #allocation1 [shape = 'u32[144,128]{1,0:T(1,128)}', space=vmem, size = 0x12000, scoped, tag = 'internal scratch']
  %s0 = inlined_call_operand.vmem [shape: f32[2,8,256], index: 0, kind: input, shape index: {}]
  %s1 = inlined_call_operand.vmem [shape: f32[8,1], index: 1, kind: output, shape index: {0}]
  %s2 = inlined_call_operand.vmem [shape: f32[8,1], index: 2, kind: output, shape index: {1}]
  %3 = xla_tuple %s1, %s2
  %s4 = sld [smem:[#allocation0]]
  $region49: #{single_layer_forward.2} parent=0
    _
  %s6 = ssub.s32 1, %s4
  %s7 = scalar_select 0, %s6, %s4
  loop: start=0, step=1, limit=4
  $region2: #{single_layer_forward.2} parent=0 // loop_pre_header
    _
  $region3: #{single_layer_forward.2} parent=0 // loop_header
    %s9 = sphi 0, %s13
    %p10 = scmp.ge.s32.totalorder %s9, 4
    %s19 = sphi 0, %s21
    %s22 = sphi 0, %s19
    %s23 = sphi 0, %s22
    %s39 = sphi 0, %s23
    %s43 = sphi 0, %s43
    %s45 = sphi 0, %s43
    %s46 = sphi 0, %s45
    %s60 = sphi 0, %s46
    %s64 = sphi 0, %s64
    %s66 = sphi 0, %s64
    %s67 = sphi 0, %s66
    %s81 = sphi 0, %s67
  $region4: #{single_layer_forward.2} parent=0 // loop_header_branch
    %12 = sbr.rel (%p10) target = $region8
  $region5: #{single_layer_forward.2} parent=0 // loop_body
    %s14 = ssub.s32 %s9, 1
    %s15 = ssub.s32 %s9, 2
    %s16 = sadd.s32 %s9, 1
    %s17 = ssub.s32 %s9, %s16
    %p18 = scmp.eq.s32.totalorder %s17, 0
    %s20 = sadd.s32 %s19, 1
    %s21 = scalar_select %p18, %s19, %s20
    %p24 = pneg %p18
    %p25 = scmp.eq.s32.totalorder %s9, 1
    %p26 = por %p24, %p25
    %p27 = scmp.ne.s32.totalorder %s19, %s22
    %p28 = scmp.eq.s32.totalorder %s9, 0
    %p29 = por %p27, %p28
    %p30 = scmp.ne.s32.totalorder %s19, %s22
    %p31 = scmp.eq.s32.totalorder %s14, 1
    %p32 = por %p30, %p31
    %p33 = scmp.ne.s32.totalorder %s22, %s23
    %p34 = scmp.eq.s32.totalorder %s14, 0
    %p35 = por %p33, %p34
    %p36 = scmp.ne.s32.totalorder %s22, %s23
    %p37 = scmp.eq.s32.totalorder %s15, 1
    %p38 = por %p36, %p37
    %p40 = scmp.ne.s32.totalorder %s23, %s39
    %p41 = scmp.eq.s32.totalorder %s15, 0
    %p42 = por %p40, %p41
    %s44 = sadd.s32 %s43, 1
    %p47 = scmp.eq.s32.totalorder %s9, 1
    %p48 = scmp.ne.s32.totalorder %s43, %s45
    %p49 = scmp.eq.s32.totalorder %s9, 0
    %p50 = por %p48, %p49
    %p51 = scmp.ne.s32.totalorder %s43, %s45
    %p52 = scmp.eq.s32.totalorder %s14, 1
    %p53 = por %p51, %p52
    %p54 = scmp.ne.s32.totalorder %s45, %s46
    %p55 = scmp.eq.s32.totalorder %s14, 0
    %p56 = por %p54, %p55
    %p57 = scmp.ne.s32.totalorder %s45, %s46
    %p58 = scmp.eq.s32.totalorder %s15, 1
    %p59 = por %p57, %p58
    %p61 = scmp.ne.s32.totalorder %s46, %s60
    %p62 = scmp.eq.s32.totalorder %s15, 0
    %p63 = por %p61, %p62
    %s65 = sadd.s32 %s64, 1
    %p68 = scmp.eq.s32.totalorder %s9, 1
    %p69 = scmp.ne.s32.totalorder %s64, %s66
    %p70 = scmp.eq.s32.totalorder %s9, 0
    %p71 = por %p69, %p70
    %p72 = scmp.ne.s32.totalorder %s64, %s66
    %p73 = scmp.eq.s32.totalorder %s14, 1
    %p74 = por %p72, %p73
    %p75 = scmp.ne.s32.totalorder %s66, %s67
    %p76 = scmp.eq.s32.totalorder %s14, 0
    %p77 = por %p75, %p76
    %p78 = scmp.ne.s32.totalorder %s66, %s67
    %p79 = scmp.eq.s32.totalorder %s15, 1
    %p80 = por %p78, %p79
    %p82 = scmp.ne.s32.totalorder %s67, %s81
    %p83 = scmp.eq.s32.totalorder %s15, 0
    %p84 = por %p82, %p83
    %p85 = scmp.le.s32.totalorder 1, %s9
    %p86 = scmp.lt.s32.totalorder %s9, 3
    %p87 = pnand %p85, %p86
    %p88 = pneg %p87
    // Predicated region
    $region9: #{single_layer_forward.2} parent=5 // pred_check
      _
    $region10: #{single_layer_forward.2} parent=5 // pred_check_branch
      %90 = sbr.rel (%p87) target = $region12
    $region11: #{single_layer_forward.2} parent=5 // pred_region
      %s91 = ssub.s32 %s9, 1
    $region12: #{single_layer_forward.2} parent=5 // pred_fallthru
      _
    %p92 = scmp.lt.s32.totalorder %s9, 2
    // Predicated region
    $region13: #{single_layer_forward.2} parent=5 // pred_check
      %p93 = pneg %p92
    $region14: #{single_layer_forward.2} parent=5 // pred_check_branch
      %95 = sbr.rel (%p93) target = $region16
    $region15: #{single_layer_forward.2} parent=5 // pred_region
      // Predicated region
      $region17: #{single_layer_forward.2} parent=15 // pred_check
        %p96 = pneg %p29
      $region18: #{single_layer_forward.2} parent=15 // pred_check_branch
        %98 = sbr.rel (%p96) target = $region20
      $region19: #{single_layer_forward.2} parent=15 // pred_region
        %p99 = scmp.lt.s32.totalorder %s9, 1
        %s100 = scalar_select %p99, %s9, 1
        %s101 = smul.addr %s100, 2
        %s102 = smul.addr %s101, 8
        %s103 = scalar_lea.vmem %s0, %s102
      $region20: #{single_layer_forward.2} parent=15 // pred_fallthru
        _
    $region16: #{single_layer_forward.2} parent=5 // pred_fallthru
      _
    %p104 = scmp.le.s32.totalorder 1, %s9
    %p105 = scmp.lt.s32.totalorder %s9, 3
    %p106 = pnand %p104, %p105
    %p107 = pneg %p106
    // Predicated region
    $region21: #{single_layer_forward.2} parent=5 // pred_check
      _
    $region22: #{single_layer_forward.2} parent=5 // pred_check_branch
      %109 = sbr.rel (%p106) target = $region24
    $region23: #{single_layer_forward.2} parent=5 // pred_region
      %s110 = ssub.s32 %s9, 1
      %p111 = scmp.lt.s32.totalorder %s14, 1
      %s112 = scalar_select %p111, %s14, 1
      %s113 = smul.addr %s112, 2
      %s114 = smul.addr %s113, 8
      %s115 = scalar_lea.vmem %s0, %s114
      %p116 = pneg %p35
      %p117 = pneg %p32
      %p118 = pneg %p56
      %p119 = pneg %p53
      %p120 = pneg %p77
      %p121 = pneg %p74
      %p122 = scmp.lt.s32.totalorder %s14, 1
      %s123 = scalar_select %p122, %s14, 1
      %s124 = smul.addr %s123, 2
      %s125 = smul.addr %s124, 8
      %s126 = scalar_lea.vmem %s0, %s125
      %p127 = scmp.eq.s32.totalorder %s14, 0
      // Predicated region
      $region25: #{single_layer_forward.2} parent=23 // pred_check
        %p128 = pneg %p127
      $region26: #{single_layer_forward.2} parent=23 // pred_check_branch
        %130 = sbr.rel (%p128) target = $region28
      $region27: #{single_layer_forward.2} parent=23 // pred_region
        %vm131 = vcmask 7168
        %132 = vst.msk [vmem:[%s1] sm:$0xff] %vm131, 0.0
        %133 = vst.msk [vmem:[%s2] sm:$0xff] %vm131, 0.0
      $region28: #{single_layer_forward.2} parent=23 // pred_fallthru
        _
      %v134 = vld [vmem:[%s126] sm:$0xff]
      %v135 = vld [vmem:[%s126 + $0x8] sm:$0xff]
      %v136 = vadd.f32 %v134, 0.0
      %v137 = vadd.f32 %v135, 0.0
      %v138 = vmul.f32 %v134, %v134
      %v139 = vmul.f32 %v135, %v135
      %v140 = vadd.f32 %v138, 0.0
      %v141 = vadd.f32 %v139, 0.0
      %v142 = vld [vmem:[%s1] sm:$0xff]
      %v143 = vadd.f32 %v136, %v137
      %144 = vadd.xlane.f32.xlu0 %v143
      %v145 = vpop.xlane.xlu0 %144
      %v146 = vadd.f32 %v142, %v145
      %vm147 = vcmask 7168
      %148 = vst.msk [vmem:[%s1] sm:$0xff] %vm147, %v146
      %v149 = vld [vmem:[%s2] sm:$0xff]
      %v150 = vadd.f32 %v140, %v141
      %151 = vadd.xlane.f32.xlu0 %v150
      %v152 = vpop.xlane.xlu0 %151
      %v153 = vadd.f32 %v149, %v152
      %154 = vst.msk [vmem:[%s2] sm:$0xff] %vm147, %v153
      // Predicated region
      $region29: #{single_layer_forward.2} parent=23 // pred_check
        %p155 = pneg %p53
      $region30: #{single_layer_forward.2} parent=23 // pred_check_branch
        %157 = sbr.rel (%p155) target = $region32
      $region31: #{single_layer_forward.2} parent=23 // pred_region
        _
      $region32: #{single_layer_forward.2} parent=23 // pred_fallthru
        _
      // Predicated region
      $region33: #{single_layer_forward.2} parent=23 // pred_check
        %p158 = pneg %p74
      $region34: #{single_layer_forward.2} parent=23 // pred_check_branch
        %160 = sbr.rel (%p158) target = $region36
      $region35: #{single_layer_forward.2} parent=23 // pred_region
        _
      $region36: #{single_layer_forward.2} parent=23 // pred_fallthru
        _
      // Predicated region
      $region37: #{single_layer_forward.2} parent=23 // pred_check
        %p161 = pneg %p53
      $region38: #{single_layer_forward.2} parent=23 // pred_check_branch
        %163 = sbr.rel (%p161) target = $region40
      $region39: #{single_layer_forward.2} parent=23 // pred_region
        _
      $region40: #{single_layer_forward.2} parent=23 // pred_fallthru
        _
      // Predicated region
      $region41: #{single_layer_forward.2} parent=23 // pred_check
        %p164 = pneg %p74
      $region42: #{single_layer_forward.2} parent=23 // pred_check_branch
        %166 = sbr.rel (%p164) target = $region44
      $region43: #{single_layer_forward.2} parent=23 // pred_region
        _
      $region44: #{single_layer_forward.2} parent=23 // pred_fallthru
        _
    $region24: #{single_layer_forward.2} parent=5 // pred_fallthru
      _
    %p167 = scmp.le.s32.totalorder 2, %s9
    // Predicated region
    $region45: #{single_layer_forward.2} parent=5 // pred_check
      %p168 = pneg %p167
    $region46: #{single_layer_forward.2} parent=5 // pred_check_branch
      %170 = sbr.rel (%p168) target = $region48
    $region47: #{single_layer_forward.2} parent=5 // pred_region
      %s171 = ssub.s32 %s9, 2
    $region48: #{single_layer_forward.2} parent=5 // pred_fallthru
      _
  $region6: #{single_layer_forward.2} parent=0 // loop_footer
    %s13 = sadd.s32 1, %s9
  $region7: #{single_layer_forward.2} parent=0 // loop_footer_branch
    %8 = sbr.rel target = $region3
  $region8: #{single_layer_forward.2} parent=0 // loop_exit
    _

// kernel: single_layer_forward.3
$region0: #{single_layer_forward.3}
  #allocation0 [shape = 'u32[]', space=smem, size = 0x4, offset = 0x4, fixed_abs, tag = 'smem constant byte address 0x4 - core index']
  #allocation1 [shape = 'u32[144,128]{1,0:T(1,128)}', space=vmem, size = 0x12000, scoped, tag = 'internal scratch']
  %s0 = inlined_call_operand.vmem [shape: f32[2,8,256], index: 0, kind: input, shape index: {}]
  %s1 = inlined_call_operand.vmem [shape: f32[8,1], index: 1, kind: input, shape index: {}]
  %s2 = inlined_call_operand.vmem [shape: f32[8,1], index: 2, kind: input, shape index: {}]
  %s3 = inlined_call_operand.vmem [shape: bf16[8,72], index: 3, kind: input, shape index: {}]
  %s4 = inlined_call_operand.vmem [shape: f32[2,16,256], index: 4, kind: output, shape index: {}]
  %s5 = sld [smem:[#allocation0]]
  $region49: #{single_layer_forward.3} parent=0
    _
  %s7 = ssub.s32 1, %s5
  %s8 = scalar_select 0, %s7, %s5
  loop: start=0, step=1, limit=4
  $region2: #{single_layer_forward.3} parent=0 // loop_pre_header
    _
  $region3: #{single_layer_forward.3} parent=0 // loop_header
    %s10 = sphi 0, %s14
    %p11 = scmp.ge.s32.totalorder %s10, 4
    %s20 = sphi 0, %s22
    %s23 = sphi 0, %s20
    %s24 = sphi 0, %s23
    %s40 = sphi 0, %s24
    %s44 = sphi 0, %s44
    %s46 = sphi 0, %s44
    %s47 = sphi 0, %s46
    %s61 = sphi 0, %s47
    %s65 = sphi 0, %s65
    %s67 = sphi 0, %s65
    %s68 = sphi 0, %s67
    %s82 = sphi 0, %s68
    %s86 = sphi 0, %s86
    %s88 = sphi 0, %s86
    %s89 = sphi 0, %s88
    %s103 = sphi 0, %s89
    %s109 = sphi 0, %s111
    %s112 = sphi 0, %s109
    %s113 = sphi 0, %s112
    %s129 = sphi 0, %s113
  $region4: #{single_layer_forward.3} parent=0 // loop_header_branch
    %13 = sbr.rel (%p11) target = $region8
  $region5: #{single_layer_forward.3} parent=0 // loop_body
    %s15 = ssub.s32 %s10, 1
    %s16 = ssub.s32 %s10, 2
    %s17 = sadd.s32 %s10, 1
    %s18 = ssub.s32 %s10, %s17
    %p19 = scmp.eq.s32.totalorder %s18, 0
    %s21 = sadd.s32 %s20, 1
    %s22 = scalar_select %p19, %s20, %s21
    %p25 = pneg %p19
    %p26 = scmp.eq.s32.totalorder %s10, 1
    %p27 = por %p25, %p26
    %p28 = scmp.ne.s32.totalorder %s20, %s23
    %p29 = scmp.eq.s32.totalorder %s10, 0
    %p30 = por %p28, %p29
    %p31 = scmp.ne.s32.totalorder %s20, %s23
    %p32 = scmp.eq.s32.totalorder %s15, 1
    %p33 = por %p31, %p32
    %p34 = scmp.ne.s32.totalorder %s23, %s24
    %p35 = scmp.eq.s32.totalorder %s15, 0
    %p36 = por %p34, %p35
    %p37 = scmp.ne.s32.totalorder %s23, %s24
    %p38 = scmp.eq.s32.totalorder %s16, 1
    %p39 = por %p37, %p38
    %p41 = scmp.ne.s32.totalorder %s24, %s40
    %p42 = scmp.eq.s32.totalorder %s16, 0
    %p43 = por %p41, %p42
    %s45 = sadd.s32 %s44, 1
    %p48 = scmp.eq.s32.totalorder %s10, 1
    %p49 = scmp.ne.s32.totalorder %s44, %s46
    %p50 = scmp.eq.s32.totalorder %s10, 0
    %p51 = por %p49, %p50
    %p52 = scmp.ne.s32.totalorder %s44, %s46
    %p53 = scmp.eq.s32.totalorder %s15, 1
    %p54 = por %p52, %p53
    %p55 = scmp.ne.s32.totalorder %s46, %s47
    %p56 = scmp.eq.s32.totalorder %s15, 0
    %p57 = por %p55, %p56
    %p58 = scmp.ne.s32.totalorder %s46, %s47
    %p59 = scmp.eq.s32.totalorder %s16, 1
    %p60 = por %p58, %p59
    %p62 = scmp.ne.s32.totalorder %s47, %s61
    %p63 = scmp.eq.s32.totalorder %s16, 0
    %p64 = por %p62, %p63
    %s66 = sadd.s32 %s65, 1
    %p69 = scmp.eq.s32.totalorder %s10, 1
    %p70 = scmp.ne.s32.totalorder %s65, %s67
    %p71 = scmp.eq.s32.totalorder %s10, 0
    %p72 = por %p70, %p71
    %p73 = scmp.ne.s32.totalorder %s65, %s67
    %p74 = scmp.eq.s32.totalorder %s15, 1
    %p75 = por %p73, %p74
    %p76 = scmp.ne.s32.totalorder %s67, %s68
    %p77 = scmp.eq.s32.totalorder %s15, 0
    %p78 = por %p76, %p77
    %p79 = scmp.ne.s32.totalorder %s67, %s68
    %p80 = scmp.eq.s32.totalorder %s16, 1
    %p81 = por %p79, %p80
    %p83 = scmp.ne.s32.totalorder %s68, %s82
    %p84 = scmp.eq.s32.totalorder %s16, 0
    %p85 = por %p83, %p84
    %s87 = sadd.s32 %s86, 1
    %p90 = scmp.eq.s32.totalorder %s10, 1
    %p91 = scmp.ne.s32.totalorder %s86, %s88
    %p92 = scmp.eq.s32.totalorder %s10, 0
    %p93 = por %p91, %p92
    %p94 = scmp.ne.s32.totalorder %s86, %s88
    %p95 = scmp.eq.s32.totalorder %s15, 1
    %p96 = por %p94, %p95
    %p97 = scmp.ne.s32.totalorder %s88, %s89
    %p98 = scmp.eq.s32.totalorder %s15, 0
    %p99 = por %p97, %p98
    %p100 = scmp.ne.s32.totalorder %s88, %s89
    %p101 = scmp.eq.s32.totalorder %s16, 1
    %p102 = por %p100, %p101
    %p104 = scmp.ne.s32.totalorder %s89, %s103
    %p105 = scmp.eq.s32.totalorder %s16, 0
    %p106 = por %p104, %p105
    %s107 = ssub.s32 %s10, %s17
    %p108 = scmp.eq.s32.totalorder %s107, 0
    %s110 = sadd.s32 %s109, 1
    %s111 = scalar_select %p108, %s109, %s110
    %p114 = pneg %p108
    %p115 = scmp.eq.s32.totalorder %s10, 1
    %p116 = por %p114, %p115
    %p117 = scmp.ne.s32.totalorder %s109, %s112
    %p118 = scmp.eq.s32.totalorder %s10, 0
    %p119 = por %p117, %p118
    %p120 = scmp.ne.s32.totalorder %s109, %s112
    %p121 = scmp.eq.s32.totalorder %s15, 1
    %p122 = por %p120, %p121
    %p123 = scmp.ne.s32.totalorder %s112, %s113
    %p124 = scmp.eq.s32.totalorder %s15, 0
    %p125 = por %p123, %p124
    %p126 = scmp.ne.s32.totalorder %s112, %s113
    %p127 = scmp.eq.s32.totalorder %s16, 1
    %p128 = por %p126, %p127
    %p130 = scmp.ne.s32.totalorder %s113, %s129
    %p131 = scmp.eq.s32.totalorder %s16, 0
    %p132 = por %p130, %p131
    %p133 = scmp.le.s32.totalorder 1, %s10
    %p134 = scmp.lt.s32.totalorder %s10, 3
    %p135 = pnand %p133, %p134
    %p136 = pneg %p135
    // Predicated region
    $region9: #{single_layer_forward.3} parent=5 // pred_check
      _
    $region10: #{single_layer_forward.3} parent=5 // pred_check_branch
      %138 = sbr.rel (%p135) target = $region12
    $region11: #{single_layer_forward.3} parent=5 // pred_region
      %s139 = ssub.s32 %s10, 1
      // Predicated region
      $region13: #{single_layer_forward.3} parent=11 // pred_check
        %p140 = pneg %p57
      $region14: #{single_layer_forward.3} parent=11 // pred_check_branch
        %142 = sbr.rel (%p140) target = $region16
      $region15: #{single_layer_forward.3} parent=11 // pred_region
        _
      $region16: #{single_layer_forward.3} parent=11 // pred_fallthru
        _
      // Predicated region
      $region17: #{single_layer_forward.3} parent=11 // pred_check
        %p143 = pneg %p78
      $region18: #{single_layer_forward.3} parent=11 // pred_check_branch
        %145 = sbr.rel (%p143) target = $region20
      $region19: #{single_layer_forward.3} parent=11 // pred_region
        _
      $region20: #{single_layer_forward.3} parent=11 // pred_fallthru
        _
      // Predicated region
      $region21: #{single_layer_forward.3} parent=11 // pred_check
        %p146 = pneg %p99
      $region22: #{single_layer_forward.3} parent=11 // pred_check_branch
        %148 = sbr.rel (%p146) target = $region24
      $region23: #{single_layer_forward.3} parent=11 // pred_region
        _
      $region24: #{single_layer_forward.3} parent=11 // pred_fallthru
        _
    $region12: #{single_layer_forward.3} parent=5 // pred_fallthru
      _
    %p149 = scmp.lt.s32.totalorder %s10, 2
    // Predicated region
    $region25: #{single_layer_forward.3} parent=5 // pred_check
      %p150 = pneg %p149
    $region26: #{single_layer_forward.3} parent=5 // pred_check_branch
      %152 = sbr.rel (%p150) target = $region28
    $region27: #{single_layer_forward.3} parent=5 // pred_region
      // Predicated region
      $region29: #{single_layer_forward.3} parent=27 // pred_check
        %p153 = pneg %p30
      $region30: #{single_layer_forward.3} parent=27 // pred_check_branch
        %155 = sbr.rel (%p153) target = $region32
      $region31: #{single_layer_forward.3} parent=27 // pred_region
        %p156 = scmp.lt.s32.totalorder %s10, 1
        %s157 = scalar_select %p156, %s10, 1
        %s158 = smul.addr %s157, 2
        %s159 = smul.addr %s158, 8
        %s160 = scalar_lea.vmem %s0, %s159
      $region32: #{single_layer_forward.3} parent=27 // pred_fallthru
        _
    $region28: #{single_layer_forward.3} parent=5 // pred_fallthru
      _
    %p161 = scmp.le.s32.totalorder 1, %s10
    %p162 = scmp.lt.s32.totalorder %s10, 3
    %p163 = pnand %p161, %p162
    %p164 = pneg %p163
    // Predicated region
    $region33: #{single_layer_forward.3} parent=5 // pred_check
      _
    $region34: #{single_layer_forward.3} parent=5 // pred_check_branch
      %166 = sbr.rel (%p163) target = $region36
    $region35: #{single_layer_forward.3} parent=5 // pred_region
      %s167 = ssub.s32 %s10, 1
      %p168 = scmp.lt.s32.totalorder %s15, 1
      %s169 = scalar_select %p168, %s15, 1
      %s170 = smul.addr %s169, 2
      %s171 = smul.addr %s170, 8
      %s172 = scalar_lea.vmem %s0, %s171
      %p173 = pneg %p36
      %p174 = pneg %p33
      %p175 = pneg %p57
      %p176 = pneg %p54
      %p177 = pneg %p78
      %p178 = pneg %p75
      %p179 = pneg %p99
      %p180 = pneg %p96
      %p181 = pneg %p125
      %p182 = pneg %p122
      %p183 = scmp.lt.s32.totalorder %s15, 1
      %s184 = scalar_select %p183, %s15, 1
      %s185 = smul.addr %s184, 4
      %s186 = smul.addr %s185, 8
      %s187 = scalar_lea.vmem %s4, %s186
      %p188 = scmp.lt.s32.totalorder %s15, 1
      %s189 = scalar_select %p188, %s15, 1
      %s190 = smul.addr %s189, 2
      %s191 = smul.addr %s190, 8
      %s192 = scalar_lea.vmem %s0, %s191
      %p193 = scmp.lt.s32.totalorder %s15, 1
      %s194 = scalar_select %p193, %s15, 1
      %s195 = smul.addr %s194, 4
      %s196 = smul.addr %s195, 8
      %s197 = scalar_lea.vmem %s4, %s196
      %v199 = vld [vmem:[%s192] sm:$0xff]
      %v200 = vld [vmem:[%s192 + $0x8] sm:$0xff]
      %201 = vst [vmem:[%s197] sm:$0xff] %v199
      %202 = vst [vmem:[%s197 + $0x8] sm:$0xff] %v200
      %v203 = vld [vmem:[%s1] sm:$0xff]
      %v204 = vld [vmem:[%s2] sm:$0xff]
      %v205 = vlaneseq
      %v206 = vand.u32 %v205, 127
      %v207 = vadd.s32 %v206, 128
      %vm208 = vcmp.lt.s32.totalorder %v206, 0
      %v209 = vsub.s32 0, %v206
      %v210 = vsel %vm208, %v209, %v206
      %v211 = vshrl.u32 %v210, 4
      %v212 = vand.u32 %v210, 15
      %v213 = vsub.s32 0, %v212
      %v214 = vsel %vm208, %v213, %v212
      %vm215 = vcmp.lt.s32.totalorder %v207, 0
      %v216 = vsub.s32 0, %v207
      %v217 = vsel %vm215, %v216, %v207
      %v218 = vshrl.u32 %v217, 4
      %v219 = vand.u32 %v217, 15
      %v220 = vsub.s32 0, %v219
      %v221 = vsel %vm215, %v220, %v219
      %vm222 = vcmp.ne.s32.totalorder %v214, 0
      %vm223 = vcmp.ne.s32.totalorder %v221, 0
      %vm224 = vcmp.lt.s32.totalorder %v214, 0
      %vm225 = vcmp.lt.s32.totalorder %v221, 0
      %vm226 = vmand %vm224, %vm222
      %vm227 = vmand %vm225, %vm223
      %v228 = vadd.s32 %v214, 16
      %v229 = vadd.s32 %v221, 16
      %v230 = vsel %vm226, %v228, %v214
      %v231 = vsel %vm227, %v229, %v221
      %vm232 = vcmp.eq.s32.totalorder %v230, 15
      %vm233 = vcmp.eq.s32.totalorder %v231, 15
      %vm234 = vcmp.eq.s32.totalorder %v230, 0
      %vm235 = vcmp.eq.s32.totalorder %v231, 0
      %v236 = vld [vmem:[%s192] sm:$0xff]
      %v237 = vld [vmem:[%s192 + $0x8] sm:$0xff]
      %239 = vset.pattern.permute.xlu0 0
      %240 = vperm.xlu0 %239, %v203
      %v241 = vpop.permute.xlu0 %240
      %v243 = vmul.f32 %v236, %v241
      %v244 = vmul.f32 %v237, %v241
      %246 = vset.pattern.permute.xlu0 0
      %247 = vperm.xlu0 %246, %v204
      %v248 = vpop.permute.xlu0 %247
      %v250 = vadd.f32 %v243, %v248
      %v251 = vadd.f32 %v244, %v248
      %v252 = vmax.f32 %v250, 0.0
      %v253 = vmax.f32 %v251, 0.0
      %v254 = vsel %vm232, 1, 0
      %v255 = vsel %vm233, 1, 0
      %vm256 = vcmp.eq.s32.totalorder %v254, 1
      %vm257 = vcmp.eq.s32.totalorder %v255, 1
      %v258 = vsel %vm256, 0.0, %v252
      %v259 = vsel %vm257, 0.0, %v253
      %v260 = vsel %vm234, 1, 0
      %v261 = vsel %vm235, 1, 0
      %vm262 = vcmp.eq.s32.totalorder %v260, 1
      %vm263 = vcmp.eq.s32.totalorder %v261, 1
      %v264 = vsel %vm262, 0.0, %v252
      %v265 = vsel %vm263, 0.0, %v253
      %268 = vrot.lane.b32.xlu0 %v258, 17
      %v269 = vpop.permute.xlu0 %268
      %270 = vrot.lane.b32.xlu0 %v259, 17
      %v271 = vpop.permute.xlu0 %270
      %vm272 = vcmask 138240
      %v273 = vsel %vm272, %v269, %v271
      %v276 = vsel %vm272, 0.0, %v269
      %279 = vrot.lane.b32.xlu0 %v252, 16
      %v280 = vpop.permute.xlu0 %279
      %281 = vrot.lane.b32.xlu0 %v253, 16
      %v282 = vpop.permute.xlu0 %281
      %vm283 = vcmask 130048
      %v284 = vsel %vm283, %v280, %v282
      %v287 = vsel %vm283, 0.0, %v280
      %290 = vrot.lane.b32.xlu0 %v264, 15
      %v291 = vpop.permute.xlu0 %290
      %292 = vrot.lane.b32.xlu0 %v265, 15
      %v293 = vpop.permute.xlu0 %292
      %vm294 = vcmask 121856
      %v295 = vsel %vm294, %v291, %v293
      %v298 = vsel %vm294, 0.0, %v291
      %299 = vrot.lane.b32.xlu0 %v258, 1
      %v300 = vpop.permute.xlu0 %299
      %301 = vrot.lane.b32.xlu0 %v259, 1
      %v302 = vpop.permute.xlu0 %301
      %vm303 = vcmask 7168
      %v304 = vsel %vm303, %v300, %v302
      %v307 = vsel %vm303, 0.0, %v300
      %308 = vrot.lane.b32.xlu0 %v264, 127
      %v309 = vpop.permute.xlu0 %308
      %310 = vrot.lane.b32.xlu0 %v265, 127
      %v311 = vpop.permute.xlu0 %310
      %vm312 = vcmask 1039360
      %v313 = vsel %vm312, %v309, %v311
      %v316 = vsel %vm312, %v311, 0.0
      %317 = vrot.lane.b32.xlu0 %v258, 113
      %v318 = vpop.permute.xlu0 %317
      %319 = vrot.lane.b32.xlu0 %v259, 113
      %v320 = vpop.permute.xlu0 %319
      %vm321 = vcmask 924672
      %v322 = vsel %vm321, %v318, %v320
      %v325 = vsel %vm321, %v320, 0.0
      %326 = vrot.lane.b32.xlu0 %v252, 112
      %v327 = vpop.permute.xlu0 %326
      %328 = vrot.lane.b32.xlu0 %v253, 112
      %v329 = vpop.permute.xlu0 %328
      %vm330 = vcmask 916480
      %v331 = vsel %vm330, %v327, %v329
      %v334 = vsel %vm330, %v329, 0.0
      %335 = vrot.lane.b32.xlu0 %v264, 111
      %v336 = vpop.permute.xlu0 %335
      %337 = vrot.lane.b32.xlu0 %v265, 111
      %v338 = vpop.permute.xlu0 %337
      %vm339 = vcmask 908288
      %v340 = vsel %vm339, %v336, %v338
      %v343 = vsel %vm339, %v338, 0.0
      %v344 = vpack.c.bf16 %v287, %v276
      %v345 = vpack.c.bf16 %v284, %v273
      %v346 = vpack.c.bf16 %v307, %v298
      %v347 = vpack.c.bf16 %v304, %v295
      %v348 = vpack.c.bf16 %v313, %v252
      %v349 = vpack.c.bf16 %v316, %v253
      %v350 = vpack.c.bf16 %v331, %v322
      %v351 = vpack.c.bf16 %v334, %v325
      %v352 = vpack.c.bf16 %v340, %v340
      %v353 = vpack.c.bf16 %v343, %v343
      %v354 = vld [vmem:[%s3] sm:$0xf]
      %vm355 = vcmask 588800
      %v357 = vsel %vm355, %v354, 0
      %vm359 = vcmask 1043456
      %v361 = vsel %vm359, %v352, 0
      %v364 = vsel %vm359, %v353, 0
      %366 = vmatprep.subr.bf16.mxu0 %v345
      %367 = vmatpush1.bf16.msra.mxu0 %v344
      %368 = vmatprep.subr.bf16.mxu0 %v347
      %369 = vmatpush1.bf16.msra.mxu0 %v346
      %370 = vmatprep.subr.bf16.mxu0 %v349
      %371 = vmatpush1.bf16.msra.mxu0 %v348
      %372 = vmatprep.subr.bf16.mxu0 %v351
      %373 = vmatpush1.bf16.msra.mxu0 %v350
      %374 = vmatprep.subr.bf16.mxu0 %v364
      %375 = vmatpush1.bf16.msra.mxu0 %v361
      %376 = vmatprep.subr.bf16.mxu0 0
      %377 = vmatpush1.bf16.msra.mxu0 0
      %378 = vmatprep.subr.bf16.mxu0 0
      %379 = vmatpush1.bf16.msra.mxu0 0
      %380 = vmatprep.subr.bf16.mxu0 0
      %381 = vmatpush1.bf16.msra.mxu0 0
      %382 = vmatprep.subr.bf16.mxu0 0
      %383 = vmatpush1.bf16.msra.mxu0 0
      %384 = vmatprep.subr.bf16.mxu0 0
      %385 = vmatpush1.bf16.msra.mxu0 0
      %386 = vmatprep.subr.bf16.mxu0 0
      %387 = vmatpush1.bf16.msra.mxu0 0
      %388 = vmatprep.subr.bf16.mxu0 0
      %389 = vmatpush1.bf16.msra.mxu0 0
      %390 = vmatprep.subr.bf16.mxu0 0
      %391 = vmatpush1.bf16.msra.mxu0 0
      %392 = vmatprep.subr.bf16.mxu0 0
      %393 = vmatpush1.bf16.msra.mxu0 0
      %394 = vmatprep.subr.bf16.mxu0 0
      %395 = vmatpush1.bf16.msra.mxu0 0
      %396 = vmatprep.subr.bf16.mxu0 0
      %397 = vmatpush1.bf16.msra.mxu0 0
      %398 = vmatprep.mubr.bf16.mxu0 0
      %399 = vmatmul.mubr.bf16.gmra.mrb[0].mxu0 %v357
      %v400 = vpop.f32.mrb[0].mxu0
      %v401 = vadd.f32 0.0, %v400
      %v402 = vpop.f32.mrb[0].mxu0
      %v403 = vadd.f32 0.0, %v402
      %v404 = vpop.f32.mrb[0].mxu0
      %v405 = vpop.f32.mrb[0].mxu0
      %406 = vdwg.mxu0
      %407 = vst [vmem:[%s197 + $0x10] sm:$0xff] %v401
      %408 = vst [vmem:[%s197 + $0x18] sm:$0xff] %v403
      %p409 = scmp.lt.s32.totalorder %s15, 1
      %s410 = scalar_select %p409, %s15, 1
      %s411 = smul.addr %s410, 4
      %s412 = smul.addr %s411, 8
      %s413 = scalar_lea.vmem %s4, %s412
      // Predicated region
      $region37: #{single_layer_forward.3} parent=35 // pred_check
        %p414 = pneg %p122
      $region38: #{single_layer_forward.3} parent=35 // pred_check_branch
        %416 = sbr.rel (%p414) target = $region40
      $region39: #{single_layer_forward.3} parent=35 // pred_region
        _
      $region40: #{single_layer_forward.3} parent=35 // pred_fallthru
        _
    $region36: #{single_layer_forward.3} parent=5 // pred_fallthru
      _
    %p417 = scmp.le.s32.totalorder 2, %s10
    // Predicated region
    $region41: #{single_layer_forward.3} parent=5 // pred_check
      %p418 = pneg %p417
    $region42: #{single_layer_forward.3} parent=5 // pred_check_branch
      %420 = sbr.rel (%p418) target = $region44
    $region43: #{single_layer_forward.3} parent=5 // pred_region
      %s421 = ssub.s32 %s10, 2
      // Predicated region
      $region45: #{single_layer_forward.3} parent=43 // pred_check
        %p422 = pneg %p128
      $region46: #{single_layer_forward.3} parent=43 // pred_check_branch
        %424 = sbr.rel (%p422) target = $region48
      $region47: #{single_layer_forward.3} parent=43 // pred_region
        %p425 = scmp.lt.s32.totalorder %s16, 1
        %s426 = scalar_select %p425, %s16, 1
        %s427 = smul.addr %s426, 4
        %s428 = smul.addr %s427, 8
        %s429 = scalar_lea.vmem %s4, %s428
      $region48: #{single_layer_forward.3} parent=43 // pred_fallthru
        _
    $region44: #{single_layer_forward.3} parent=5 // pred_fallthru
      _
  $region6: #{single_layer_forward.3} parent=0 // loop_footer
    %s14 = sadd.s32 1, %s10
  $region7: #{single_layer_forward.3} parent=0 // loop_footer_branch
    %9 = sbr.rel target = $region3
  $region8: #{single_layer_forward.3} parent=0 // loop_exit
    _

</llo_original>
